<compile_context>
chip_gen: v7x
topology: tpu7x:2x2x1
jax: 0.10.0
libtpu: 0.0.40
codegen_flags: <defaults>
</compile_context>

<pallas_src>
import functools

import jax
import jax.numpy as jnp
from jax.experimental import pallas as pl
from jax.experimental.pallas import tpu as pltpu


OUT_PAD = 128          # lane-dense output width; real logits live in [:, :out_dim]
DEFAULT_TM = 256       # row tile: multiple of 128, sized for v7x 64 MiB VMEM @ bf16


def _round_up(x, m):
    return ((x + m - 1) // m) * m


def _mish(x):
    # mish(x) = x * tanh(softplus(x)); stable exp/log1p softplus, f32 math.
    sp = jnp.maximum(x, 0.0) + jnp.log1p(jnp.exp(-jnp.abs(x)))
    return x * jnp.tanh(sp)


# ----------------------------------------------------------------------------
# Probe: can this backend single-buffer a grid-constant block via
# pipeline_mode=pl.Buffered(1)?  (Halves weight VMEM; falls back cleanly.)
# ----------------------------------------------------------------------------
@functools.lru_cache(maxsize=None)
def _single_buffer_supported():
    try:
        def _copy(x_ref, o_ref):
            o_ref[...] = x_ref[...]

        spec = pl.BlockSpec((8, 128), lambda i: (0, 0),
                            pipeline_mode=pl.Buffered(1))
        fn = pl.pallas_call(
            _copy,
            out_shape=jax.ShapeDtypeStruct((8, 128), jnp.float32),
            grid=(1,),
            in_specs=[spec],
            out_specs=pl.BlockSpec((8, 128), lambda i: (0, 0)),
        )
        jax.block_until_ready(fn(jnp.zeros((8, 128), jnp.float32)))
        return True
    except Exception:
        return False


def _resident_spec(shape):
    """Full-array block with a constant index map (weights/biases)."""
    index_map = lambda i: tuple(0 for _ in shape)
    if _single_buffer_supported():
        return pl.BlockSpec(shape, index_map, pipeline_mode=pl.Buffered(1))
    return pl.BlockSpec(shape, index_map)


# ----------------------------------------------------------------------------
# Pallas kernel: fused 3-layer MLP head with Mish activations.
# Matches nn.Sequential(Linear(4H,2H), Mish, Linear(2H,H), Mish,
#                       Dropout(0.1), Linear(H,out)); Dropout is identity at
# inference.  Inputs arrive as 4 H-wide pieces (the un-concatenated last-4
# hidden states); the output is padded to OUT_PAD lanes.
# ----------------------------------------------------------------------------
def _mlp_head_kernel(x0_ref, x1_ref, x2_ref, x3_ref,
                     w1_ref, b1_ref, w2_ref, b2_ref, w3_ref, b3_ref,
                     o_ref, *, hidden):
    H = hidden

    def dot_bf16(x, w):
        return jnp.dot(x.astype(jnp.bfloat16), w,
                       preferred_element_type=jnp.float32)

    # Layer 1: fused concat -- sum of 4 partial matmuls == [x0|x1|x2|x3] @ W1.
    h = dot_bf16(x0_ref[...], w1_ref[0 * H:1 * H, :])
    h += dot_bf16(x1_ref[...], w1_ref[1 * H:2 * H, :])
    h += dot_bf16(x2_ref[...], w1_ref[2 * H:3 * H, :])
    h += dot_bf16(x3_ref[...], w1_ref[3 * H:4 * H, :])
    h = _mish(h + b1_ref[...])                               # f32 [tm, 2H]

    # Layer 2
    h = dot_bf16(h, w2_ref[...])
    h = _mish(h + b2_ref[...])                               # f32 [tm, H]

    # Dropout(p=0.1) -> identity (inference).
    # Layer 3: output padded to 128 lanes -> unmasked, lane-dense store.
    o = dot_bf16(h, w3_ref[...])
    o_ref[...] = (o + b3_ref[...]).astype(o_ref.dtype)       # f32 [tm, OUT_PAD]


def mlp_head(x_parts, w1, b1, w2, b2, w3, b3, out_dim, *, tm=DEFAULT_TM):
    """x_parts: 4 tensors [M, H] (last-4 hidden states). Returns [M, out_dim] f32."""
    assert len(x_parts) == 4
    M, H = x_parts[0].shape

    # Large 128-aligned row tiles when M is big (fills the MXU M dim and keeps
    # the grid >= 2 steps so both v7x TensorCores get work); single full block
    # for small inputs.
    if M >= tm:
        tm_eff = tm
        m_pad = _round_up(M, tm)
    else:
        tm_eff = M
        m_pad = M
    if m_pad != M:
        x_parts = [jnp.pad(xp, ((0, m_pad - M), (0, 0))) for xp in x_parts]
    grid = (m_pad // tm_eff,)

    x_spec = pl.BlockSpec((tm_eff, H), lambda i: (i, 0))
    kernel = functools.partial(_mlp_head_kernel, hidden=H)

    out = pl.pallas_call(
        kernel,
        out_shape=jax.ShapeDtypeStruct((m_pad, OUT_PAD), jnp.float32),
        grid_spec=pltpu.PrefetchScalarGridSpec(
            num_scalar_prefetch=0,
            grid=grid,
            in_specs=[x_spec, x_spec, x_spec, x_spec,
                      _resident_spec(w1.shape), _resident_spec(b1.shape),
                      _resident_spec(w2.shape), _resident_spec(b2.shape),
                      _resident_spec(w3.shape), _resident_spec(b3.shape)],
            out_specs=pl.BlockSpec((tm_eff, OUT_PAD), lambda i: (i, 0)),
        ),
        compiler_params=pltpu.CompilerParams(
            dimension_semantics=("parallel",),
            vmem_limit_bytes=48 * 1024 * 1024),
    )(*x_parts, w1, b1, w2, b2, w3, b3)
    return out[:M, :out_dim]


# ----------------------------------------------------------------------------
# Deterministic parameter init (shapes implied by Reader.__init__ with
# hidden_size = H).  Linear weights stored transposed [in, out] in bf16 for
# the MXU; the output layer is zero-padded to OUT_PAD columns.
# ----------------------------------------------------------------------------
def init_head_params(key, hidden, out_dim):
    k1, k2, k3 = jax.random.split(key, 3)
    scale = 0.05
    w1 = (scale * jax.random.normal(k1, (4 * hidden, 2 * hidden), jnp.float32)
          ).astype(jnp.bfloat16)
    b1 = jnp.zeros((1, 2 * hidden), jnp.float32)
    w2 = (scale * jax.random.normal(k2, (2 * hidden, hidden), jnp.float32)
          ).astype(jnp.bfloat16)
    b2 = jnp.zeros((1, hidden), jnp.float32)
    w3 = jnp.zeros((hidden, OUT_PAD), jnp.float32)
    w3 = w3.at[:, :out_dim].set(
        scale * jax.random.normal(k3, (hidden, out_dim), jnp.float32))
    w3 = w3.astype(jnp.bfloat16)
    b3 = jnp.zeros((1, OUT_PAD), jnp.float32)   # padded cols carry 0 bias
    return w1, b1, w2, b2, w3, b3, out_dim


# ----------------------------------------------------------------------------
# Stand-in "BERT": deterministic embeddings producing 4 hidden-state tensors.
# TODO(synk): the pretrained AutoModel transformer encoder is not replicated;
# this stand-in only supplies the last-4 hidden states consumed by the heads.
# ----------------------------------------------------------------------------
def standin_bert_hidden_states(params, input_ids, attention_mask,
                               token_type_ids):
    emb = jnp.take(params["tok_emb"], input_ids, axis=0)            # [B,S,H]
    emb = emb + jnp.take(params["typ_emb"], token_type_ids, axis=0)
    emb = emb * attention_mask[..., None].astype(jnp.float32)
    hs = []
    for m in params["layer_mix"]:                                   # 4 layers
        emb = jnp.tanh(emb @ m)
        hs.append(emb.astype(jnp.bfloat16))   # bf16 halves head-input HBM bytes
    return hs  # list of 4 x [B, S, H] bf16


# ----------------------------------------------------------------------------
# Reader forward (heads run in the Pallas kernel; glue/loss in plain JAX).
# ----------------------------------------------------------------------------
def reader_forward(params, input_ids, attention_mask, token_type_ids,
                   start_positions=None, end_positions=None):
    B, S = input_ids.shape

    hidden_states = standin_bert_hidden_states(
        params, input_ids, attention_mask, token_type_ids)

    # ---- seq_span head (Pallas): per-token MLP -> 2 logits ----
    # Concat of the last-4 hidden states is fused into the kernel: the 4
    # H-wide pieces are streamed separately (no [B*S, 4H] HBM materialization).
    tok_parts = [h.reshape(B * S, -1) for h in hidden_states]
    span_logits = mlp_head(tok_parts, *params["span"])               # [B*S, 2]
    span_logits = span_logits.reshape(B, S, 2)
    start_logits = span_logits[:, :, 0]
    end_logits = span_logits[:, :, 1]

    # ---- seq_plausibility head (Pallas): CLS vectors -> 1 score ----
    cls_parts = [h[:, 0, :] for h in hidden_states]                  # 4 x [B,H]
    plausibility = mlp_head(cls_parts, *params["plaus"]).reshape(-1)

    loss = loss_span = loss_plaus = None
    if start_positions is not None and end_positions is not None:
        # PyTorch reference: each CrossEntropyLoss call sees batch=1 (so it is
        # the per-example CE); valid (start,end) ranges are summed and the
        # final division is by batch_size, not the valid count.
        valid = ~((start_positions == 0) & (end_positions == 0))    # [B, R]
        lse_s = jax.nn.logsumexp(start_logits, axis=1)              # [B]
        lse_e = jax.nn.logsumexp(end_logits, axis=1)
        gat_s = jnp.take_along_axis(start_logits, start_positions, axis=1)
        gat_e = jnp.take_along_axis(end_logits, end_positions, axis=1)
        ce = (lse_s[:, None] - gat_s) + (lse_e[:, None] - gat_e)    # [B, R]
        loss_span = jnp.sum(jnp.where(valid, ce, 0.0)) / B

        # BCEWithLogitsLoss: mean(softplus(x) - t * x)
        targets = (start_positions[:, 0] != 0).astype(jnp.float32)
        loss_plaus = jnp.mean(jax.nn.softplus(plausibility)
                              - targets * plausibility)
        loss = loss_span + loss_plaus

    return {
        "start_logits": start_logits,
        "end_logits": end_logits,
        "plausibility_scores": plausibility,
        "loss": loss,
        "loss_span": loss_span,
        "loss_plausibility": loss_plaus,
    }


# ----------------------------------------------------------------------------
if __name__ == "__main__":
    B, S, H, VOCAB, RANGES = 2, 8, 32, 100, 2

    root = jax.random.PRNGKey(0)
    k_tok, k_typ, k_mix, k_span, k_plaus, k_ids, k_pos = jax.random.split(root, 7)

    params = {
        "tok_emb": 0.1 * jax.random.normal(k_tok, (VOCAB, H), jnp.float32),
        "typ_emb": 0.1 * jax.random.normal(k_typ, (2, H), jnp.float32),
        "layer_mix": [
            0.3 * jax.random.normal(k, (H, H), jnp.float32)
            for k in jax.random.split(k_mix, 4)
        ],
        "span": init_head_params(k_span, H, 2),
        "plaus": init_head_params(k_plaus, H, 1),
    }

    input_ids = jax.random.randint(k_ids, (B, S), 0, VOCAB, dtype=jnp.int32)
    attention_mask = jnp.ones((B, S), jnp.int32)
    token_type_ids = jnp.concatenate(
        [jnp.zeros((B, S // 2), jnp.int32), jnp.ones((B, S // 2), jnp.int32)],
        axis=1)
    start_positions = jax.random.randint(k_pos, (B, RANGES), 0, S,
                                         dtype=jnp.int32)
    end_positions = jnp.minimum(start_positions + 1, S - 1)

    out = reader_forward(params, input_ids, attention_mask, token_type_ids,
                         start_positions, end_positions)
    jax.block_until_ready(out)

    assert out["start_logits"].shape == (B, S)
    assert out["end_logits"].shape == (B, S)
    assert out["plausibility_scores"].shape == (B,)
    assert jnp.isfinite(out["loss"])
    print("KERNEL_OK")
</pallas_src>

<mosaic_0001>
module attributes {stable_mosaic.version = 11 : i64} {
  func.func @_copy(%arg0: i32, %arg1: memref<8x128xf32, #tpu.memory_space<vmem>>, %arg2: memref<8x128xf32, #tpu.memory_space<vmem>>) attributes {dimension_semantics = [#tpu.dimension_semantics<arbitrary>], iteration_bounds = array<i64: 1>, scalar_prefetch = 0 : i64, scratch_operands = 0 : i64, tpu.core_type = #tpu.core_type<tc>, window_params = [{pipeline_mode = #tpu.pipeline_mode<synchronous>, transform_indices = @transform_0, window_bounds = array<i64: 8, 128>}, {pipeline_mode = #tpu.pipeline_mode<synchronous>, transform_indices = @transform_1, window_bounds = array<i64: 8, 128>}]} {
    %c0 = arith.constant 0 : index
    %c0_0 = arith.constant 0 : index
    %0 = vector.load %arg1[%c0, %c0_0] : memref<8x128xf32, #tpu.memory_space<vmem>>, vector<8x128xf32>
    %c0_1 = arith.constant 0 : index
    %c0_2 = arith.constant 0 : index
    %1 = vector.load %arg2[%c0_1, %c0_2] : memref<8x128xf32, #tpu.memory_space<vmem>>, vector<8x128xf32>
    tpu.vector_store %arg2[%c0_1, %c0_2], %0 {strides = array<i32>} : memref<8x128xf32, #tpu.memory_space<vmem>>, vector<8x128xf32>,
    return
  }
  func.func @transform_0(%arg0: i32) -> (i32, i32) {
    %c0_i32 = arith.constant 0 : i32
    %c0_i32_0 = arith.constant 0 : i32
    %c0_i32_1 = arith.constant 0 : i32
    return %c0_i32, %c0_i32_0 : i32, i32
  }
  func.func @transform_1(%arg0: i32) -> (i32, i32) {
    %c0_i32 = arith.constant 0 : i32
    %c0_i32_0 = arith.constant 0 : i32
    %c0_i32_1 = arith.constant 0 : i32
    return %c0_i32, %c0_i32_0 : i32, i32
  }
}

module attributes {stable_mosaic.version = 11 : i64} {
  func.func @_mlp_head_kernel(%arg0: i32, %arg1: memref<16x32xbf16, #tpu.memory_space<vmem>>, %arg2: memref<16x32xbf16, #tpu.memory_space<vmem>>, %arg3: memref<16x32xbf16, #tpu.memory_space<vmem>>, %arg4: memref<16x32xbf16, #tpu.memory_space<vmem>>, %arg5: memref<128x64xbf16, #tpu.memory_space<vmem>>, %arg6: memref<1x64xf32, #tpu.memory_space<vmem>>, %arg7: memref<64x32xbf16, #tpu.memory_space<vmem>>, %arg8: memref<1x32xf32, #tpu.memory_space<vmem>>, %arg9: memref<32x128xbf16, #tpu.memory_space<vmem>>, %arg10: memref<1x128xf32, #tpu.memory_space<vmem>>, %arg11: memref<16x128xf32, #tpu.memory_space<vmem>>) attributes {dimension_semantics = [#tpu.dimension_semantics<parallel>], iteration_bounds = array<i64: 1>, scalar_prefetch = 0 : i64, scratch_operands = 0 : i64, tpu.core_type = #tpu.core_type<tc>, window_params = [{transform_indices = @transform_0, window_bounds = array<i64: 16, 32>}, {transform_indices = @transform_1, window_bounds = array<i64: 16, 32>}, {transform_indices = @transform_2, window_bounds = array<i64: 16, 32>}, {transform_indices = @transform_3, window_bounds = array<i64: 16, 32>}, {pipeline_mode = #tpu.pipeline_mode<synchronous>, transform_indices = @transform_4, window_bounds = array<i64: 128, 64>}, {pipeline_mode = #tpu.pipeline_mode<synchronous>, transform_indices = @transform_5, window_bounds = array<i64: 1, 64>}, {pipeline_mode = #tpu.pipeline_mode<synchronous>, transform_indices = @transform_6, window_bounds = array<i64: 64, 32>}, {pipeline_mode = #tpu.pipeline_mode<synchronous>, transform_indices = @transform_7, window_bounds = array<i64: 1, 32>}, {pipeline_mode = #tpu.pipeline_mode<synchronous>, transform_indices = @transform_8, window_bounds = array<i64: 32, 128>}, {pipeline_mode = #tpu.pipeline_mode<synchronous>, transform_indices = @transform_9, window_bounds = array<i64: 1, 128>}, {transform_indices = @transform_10, window_bounds = array<i64: 16, 128>}]} {
    %c0 = arith.constant 0 : index
    %c0_0 = arith.constant 0 : index
    %0 = vector.load %arg1[%c0, %c0_0] : memref<16x32xbf16, #tpu.memory_space<vmem>>, vector<16x32xbf16>
    %c0_1 = arith.constant 0 : index
    %c0_2 = arith.constant 0 : index
    %1 = vector.load %arg5[%c0_1, %c0_2] : memref<128x64xbf16, #tpu.memory_space<vmem>>, vector<32x64xbf16>
    %cst = arith.constant dense<0.000000e+00> : vector<16x64xf32>
    %2 = tpu.matmul %0, %1, %cst {dimension_numbers = #tpu.dot_dimension_numbers<[1], [0], [0], [1], [0, 0, 1, 1], [], []>} : vector<16x32xbf16>, vector<32x64xbf16>, vector<16x64xf32> -> vector<16x64xf32>
    %c0_3 = arith.constant 0 : index
    %c0_4 = arith.constant 0 : index
    %3 = vector.load %arg2[%c0_3, %c0_4] : memref<16x32xbf16, #tpu.memory_space<vmem>>, vector<16x32xbf16>
    %c32 = arith.constant 32 : index
    %c0_5 = arith.constant 0 : index
    %4 = vector.load %arg5[%c32, %c0_5] : memref<128x64xbf16, #tpu.memory_space<vmem>>, vector<32x64xbf16>
    %cst_6 = arith.constant dense<0.000000e+00> : vector<16x64xf32>
    %5 = tpu.matmul %3, %4, %cst_6 {dimension_numbers = #tpu.dot_dimension_numbers<[1], [0], [0], [1], [0, 0, 1, 1], [], []>} : vector<16x32xbf16>, vector<32x64xbf16>, vector<16x64xf32> -> vector<16x64xf32>
    %6 = arith.addf %2, %5 : vector<16x64xf32>
    %c0_7 = arith.constant 0 : index
    %c0_8 = arith.constant 0 : index
    %7 = vector.load %arg3[%c0_7, %c0_8] : memref<16x32xbf16, #tpu.memory_space<vmem>>, vector<16x32xbf16>
    %c64 = arith.constant 64 : index
    %c0_9 = arith.constant 0 : index
    %8 = vector.load %arg5[%c64, %c0_9] : memref<128x64xbf16, #tpu.memory_space<vmem>>, vector<32x64xbf16>
    %cst_10 = arith.constant dense<0.000000e+00> : vector<16x64xf32>
    %9 = tpu.matmul %7, %8, %cst_10 {dimension_numbers = #tpu.dot_dimension_numbers<[1], [0], [0], [1], [0, 0, 1, 1], [], []>} : vector<16x32xbf16>, vector<32x64xbf16>, vector<16x64xf32> -> vector<16x64xf32>
    %10 = arith.addf %6, %9 : vector<16x64xf32>
    %c0_11 = arith.constant 0 : index
    %c0_12 = arith.constant 0 : index
    %11 = vector.load %arg4[%c0_11, %c0_12] : memref<16x32xbf16, #tpu.memory_space<vmem>>, vector<16x32xbf16>
    %c96 = arith.constant 96 : index
    %c0_13 = arith.constant 0 : index
    %12 = vector.load %arg5[%c96, %c0_13] : memref<128x64xbf16, #tpu.memory_space<vmem>>, vector<32x64xbf16>
    %cst_14 = arith.constant dense<0.000000e+00> : vector<16x64xf32>
    %13 = tpu.matmul %11, %12, %cst_14 {dimension_numbers = #tpu.dot_dimension_numbers<[1], [0], [0], [1], [0, 0, 1, 1], [], []>} : vector<16x32xbf16>, vector<32x64xbf16>, vector<16x64xf32> -> vector<16x64xf32>
    %14 = arith.addf %10, %13 : vector<16x64xf32>
    %c0_15 = arith.constant 0 : index
    %c0_16 = arith.constant 0 : index
    %15 = vector.load %arg6[%c0_15, %c0_16] : memref<1x64xf32, #tpu.memory_space<vmem>>, vector<1x64xf32>
    %16 = vector.broadcast %15 : vector<1x64xf32> to vector<16x64xf32>
    %17 = arith.addf %14, %16 : vector<16x64xf32>
    %cst_17 = arith.constant 0.000000e+00 : f32
    %18 = vector.broadcast %cst_17 : f32 to vector<16x64xf32>
    %19 = arith.maximumf %17, %18 : vector<16x64xf32>
    %20 = math.absf %17 : vector<16x64xf32>
    %cst_18 = arith.constant 0.000000e+00 : f32
    %21 = vector.broadcast %cst_18 : f32 to vector<16x64xf32>
    %22 = arith.subf %21, %20 : vector<16x64xf32>
    %23 = math.exp %22 : vector<16x64xf32>
    %24 = math.log1p %23 : vector<16x64xf32>
    %25 = arith.addf %19, %24 : vector<16x64xf32>
    %26 = math.tanh %25 : vector<16x64xf32>
    %27 = arith.mulf %17, %26 : vector<16x64xf32>
    %c0_19 = arith.constant 0 : index
    %c0_20 = arith.constant 0 : index
    %28 = vector.load %arg7[%c0_19, %c0_20] : memref<64x32xbf16, #tpu.memory_space<vmem>>, vector<64x32xbf16>
    %29 = arith.truncf %27 : vector<16x64xf32> to vector<16x64xbf16>
    %cst_21 = arith.constant dense<0.000000e+00> : vector<16x32xf32>
    %30 = tpu.matmul %29, %28, %cst_21 {dimension_numbers = #tpu.dot_dimension_numbers<[1], [0], [0], [1], [0, 0, 1, 1], [], []>} : vector<16x64xbf16>, vector<64x32xbf16>, vector<16x32xf32> -> vector<16x32xf32>
    %c0_22 = arith.constant 0 : index
    %c0_23 = arith.constant 0 : index
    %31 = vector.load %arg8[%c0_22, %c0_23] : memref<1x32xf32, #tpu.memory_space<vmem>>, vector<1x32xf32>
    %32 = vector.broadcast %31 : vector<1x32xf32> to vector<16x32xf32>
    %33 = arith.addf %30, %32 : vector<16x32xf32>
    %cst_24 = arith.constant 0.000000e+00 : f32
    %34 = vector.broadcast %cst_24 : f32 to vector<16x32xf32>
    %35 = arith.maximumf %33, %34 : vector<16x32xf32>
    %36 = math.absf %33 : vector<16x32xf32>
    %cst_25 = arith.constant 0.000000e+00 : f32
    %37 = vector.broadcast %cst_25 : f32 to vector<16x32xf32>
    %38 = arith.subf %37, %36 : vector<16x32xf32>
    %39 = math.exp %38 : vector<16x32xf32>
    %40 = math.log1p %39 : vector<16x32xf32>
    %41 = arith.addf %35, %40 : vector<16x32xf32>
    %42 = math.tanh %41 : vector<16x32xf32>
    %43 = arith.mulf %33, %42 : vector<16x32xf32>
    %c0_26 = arith.constant 0 : index
    %c0_27 = arith.constant 0 : index
    %44 = vector.load %arg9[%c0_26, %c0_27] : memref<32x128xbf16, #tpu.memory_space<vmem>>, vector<32x128xbf16>
    %45 = arith.truncf %43 : vector<16x32xf32> to vector<16x32xbf16>
    %cst_28 = arith.constant dense<0.000000e+00> : vector<16x128xf32>
    %46 = tpu.matmul %45, %44, %cst_28 {dimension_numbers = #tpu.dot_dimension_numbers<[1], [0], [0], [1], [0, 0, 1, 1], [], []>} : vector<16x32xbf16>, vector<32x128xbf16>, vector<16x128xf32> -> vector<16x128xf32>
    %c0_29 = arith.constant 0 : index
    %c0_30 = arith.constant 0 : index
    %47 = vector.load %arg10[%c0_29, %c0_30] : memref<1x128xf32, #tpu.memory_space<vmem>>, vector<1x128xf32>
    %48 = vector.broadcast %47 : vector<1x128xf32> to vector<16x128xf32>
    %49 = arith.addf %46, %48 : vector<16x128xf32>
    %c0_31 = arith.constant 0 : index
    %c0_32 = arith.constant 0 : index
    %50 = vector.load %arg11[%c0_31, %c0_32] : memref<16x128xf32, #tpu.memory_space<vmem>>, vector<16x128xf32>
    tpu.vector_store %arg11[%c0_31, %c0_32], %49 {strides = array<i32>} : memref<16x128xf32, #tpu.memory_space<vmem>>, vector<16x128xf32>,
    return
  }
  func.func @transform_0(%arg0: i32) -> (i32, i32) {
    %c0_i32 = arith.constant 0 : i32
    %c0_i32_0 = arith.constant 0 : i32
    return %arg0, %c0_i32 : i32, i32
  }
  func.func @transform_1(%arg0: i32) -> (i32, i32) {
    %c0_i32 = arith.constant 0 : i32
    %c0_i32_0 = arith.constant 0 : i32
    return %arg0, %c0_i32 : i32, i32
  }
  func.func @transform_2(%arg0: i32) -> (i32, i32) {
    %c0_i32 = arith.constant 0 : i32
    %c0_i32_0 = arith.constant 0 : i32
    return %arg0, %c0_i32 : i32, i32
  }
  func.func @transform_3(%arg0: i32) -> (i32, i32) {
    %c0_i32 = arith.constant 0 : i32
    %c0_i32_0 = arith.constant 0 : i32
    return %arg0, %c0_i32 : i32, i32
  }
  func.func @transform_4(%arg0: i32) -> (i32, i32) {
    %c0_i32 = arith.constant 0 : i32
    %c0_i32_0 = arith.constant 0 : i32
    %c0_i32_1 = arith.constant 0 : i32
    return %c0_i32, %c0_i32_0 : i32, i32
  }
  func.func @transform_5(%arg0: i32) -> (i32, i32) {
    %c0_i32 = arith.constant 0 : i32
    %c0_i32_0 = arith.constant 0 : i32
    %c0_i32_1 = arith.constant 0 : i32
    return %c0_i32, %c0_i32_0 : i32, i32
  }
  func.func @transform_6(%arg0: i32) -> (i32, i32) {
    %c0_i32 = arith.constant 0 : i32
    %c0_i32_0 = arith.constant 0 : i32
    %c0_i32_1 = arith.constant 0 : i32
    return %c0_i32, %c0_i32_0 : i32, i32
  }
  func.func @transform_7(%arg0: i32) -> (i32, i32) {
    %c0_i32 = arith.constant 0 : i32
    %c0_i32_0 = arith.constant 0 : i32
    %c0_i32_1 = arith.constant 0 : i32
    return %c0_i32, %c0_i32_0 : i32, i32
  }
  func.func @transform_8(%arg0: i32) -> (i32, i32) {
    %c0_i32 = arith.constant 0 : i32
    %c0_i32_0 = arith.constant 0 : i32
    %c0_i32_1 = arith.constant 0 : i32
    return %c0_i32, %c0_i32_0 : i32, i32
  }
  func.func @transform_9(%arg0: i32) -> (i32, i32) {
    %c0_i32 = arith.constant 0 : i32
    %c0_i32_0 = arith.constant 0 : i32
    %c0_i32_1 = arith.constant 0 : i32
    return %c0_i32, %c0_i32_0 : i32, i32
  }
  func.func @transform_10(%arg0: i32) -> (i32, i32) {
    %c0_i32 = arith.constant 0 : i32
    %c0_i32_0 = arith.constant 0 : i32
    return %arg0, %c0_i32 : i32, i32
  }
}

</mosaic_0001>

<llo_original>
// kernel: tpu_custom_call.1
$region0: #{tpu_custom_call.1}
  #allocation0 [shape = 'u32[]', space=smem, size = 0x4, offset = 0x4, fixed_abs, tag = 'smem constant byte address 0x4 - core index']
  #allocation1 [shape = 'u32[144,128]{1,0:T(1,128)}', space=vmem, size = 0x12000, scoped, tag = 'internal scratch']
  %s0 = inlined_call_operand.hbm [shape: f32[8,128], index: 0, kind: input, shape index: {}]
  %s1 = inlined_call_operand.hbm [shape: f32[8,128], index: 1, kind: output, shape index: {}]
  %s2 = sld [smem:[#allocation0]]
  $region18: #{tpu_custom_call.1} parent=0
    _
  %s4 = ssub.s32 1, %s2
  %s5 = scalar_select 0, %s4, %s2
  $region1: #{tpu_custom_call.1} parent=0
    #allocation2 [shape = 'u8[4096]{0}', space=vmem, size = 0x1000, scoped, tag = 'input window, operand 0, single buffered']
    #allocation3 [shape = 's32[1]{0}', space=sflag, size = 0x4, scoped, tag = 'scoped memory for tpu_custom_call.1']
    #allocation4 [shape = 's32[1]{0}', space=sflag, size = 0x4, scoped, tag = 'scoped memory for tpu_custom_call.1']
    #allocation5 [shape = 'u8[4096]{0}', space=vmem, size = 0x1000, scoped, tag = 'output window, operand 0, single buffered']
    %6 = vsyncpa [#allocation3], 0
    %7 = vsyncpa [#allocation4], 0
    // Predicated region
    $region2: #{tpu_custom_call.1} parent=1 // pred_check
      _
    $region3: #{tpu_custom_call.1} parent=1 // pred_check_branch
      %9 = sbr.rel (0) target = $region5
    $region4: #{tpu_custom_call.1} parent=1 // pred_region
      %s11 = ssub.s32 128, 128
      %12 = vsyncadd [#allocation3], %s11
      %s14 = sshll.u32 [#allocation2], 4
      %s15 = int_to_ptr.vmem [resolvable:$true] %s14
      %17 = dma.hbm_to_vmem [thread:$0]  %s0, 128, %s15, [#allocation3]
    $region5: #{tpu_custom_call.1} parent=1 // pred_fallthru
      _
    // Predicated region
    $region6: #{tpu_custom_call.1} parent=1 // pred_check
      _
    $region7: #{tpu_custom_call.1} parent=1 // pred_check_branch
      %19 = sbr.rel (0) target = $region9
    $region8: #{tpu_custom_call.1} parent=1 // pred_region
      %20 = dma.done [#allocation3], 128
    $region9: #{tpu_custom_call.1} parent=1 // pred_fallthru
      _
    %v21 = vld [vmem:[#allocation2] sm:$0xff]
    %22 = vst [vmem:[#allocation5] sm:$0xff] %v21
    // Predicated region
    $region10: #{tpu_custom_call.1} parent=1 // pred_check
      _
    $region11: #{tpu_custom_call.1} parent=1 // pred_check_branch
      %24 = sbr.rel (0) target = $region13
    $region12: #{tpu_custom_call.1} parent=1 // pred_region
      %s26 = ssub.s32 128, 128
      %27 = vsyncadd [#allocation4], %s26
      %s29 = sshll.u32 [#allocation5], 4
      %s30 = int_to_ptr.vmem [resolvable:$true] %s29
      %32 = dma.vmem_to_hbm [thread:$0]  %s30, 128, %s1, [#allocation4]
    $region13: #{tpu_custom_call.1} parent=1 // pred_fallthru
      _
    // Predicated region
    $region14: #{tpu_custom_call.1} parent=1 // pred_check
      _
    $region15: #{tpu_custom_call.1} parent=1 // pred_check_branch
      %34 = sbr.rel (0) target = $region17
    $region16: #{tpu_custom_call.1} parent=1 // pred_region
      %35 = dma.done [#allocation4], 128
    $region17: #{tpu_custom_call.1} parent=1 // pred_fallthru
      _
    %36 = vsyncpa [#allocation3], 1
    %37 = vsyncpa [#allocation4], 1

// kernel: tpu_custom_call.1
$region0: #{tpu_custom_call.1}
  #allocation0 [shape = 'u32[]', space=smem, size = 0x4, offset = 0x4, fixed_abs, tag = 'smem constant byte address 0x4 - core index']
  #allocation1 [shape = 'u32[144,128]{1,0:T(1,128)}', space=vmem, size = 0x12000, scoped, tag = 'internal scratch']
  %s0 = inlined_call_operand.vmem [shape: bf16[16,32], index: 0, kind: input, shape index: {}]
  %s1 = inlined_call_operand.vmem [shape: bf16[16,32], index: 1, kind: input, shape index: {}]
  %s2 = inlined_call_operand.vmem [shape: bf16[16,32], index: 2, kind: input, shape index: {}]
  %s3 = inlined_call_operand.vmem [shape: bf16[16,32], index: 3, kind: input, shape index: {}]
  %s4 = inlined_call_operand.vmem [shape: bf16[128,64], index: 4, kind: input, shape index: {}]
  %s5 = inlined_call_operand.vmem [shape: f32[1,64], index: 5, kind: input, shape index: {}]
  %s6 = inlined_call_operand.vmem [shape: bf16[64,32], index: 6, kind: input, shape index: {}]
  %s7 = inlined_call_operand.vmem [shape: f32[1,32], index: 7, kind: input, shape index: {}]
  %s8 = inlined_call_operand.vmem [shape: bf16[32,128], index: 8, kind: input, shape index: {}]
  %s9 = inlined_call_operand.vmem [shape: f32[1,128], index: 9, kind: input, shape index: {}]
  %s10 = inlined_call_operand.hbm [shape: f32[16,128], index: 10, kind: output, shape index: {}]
  %s11 = sld [smem:[#allocation0]]
  $region50: #{tpu_custom_call.1} parent=0
    _
  %s13 = ssub.s32 1, %s11
  %s14 = scalar_select 0, %s13, %s11
  $region1: #{tpu_custom_call.1} parent=0
    #allocation2 [shape = 'u8[8192]{0}', space=vmem, size = 0x2000, scoped, tag = 'output window, operand 0, single buffered']
    #allocation3 [shape = 's32[1]{0}', space=sflag, size = 0x4, scoped, tag = 'scoped memory for tpu_custom_call.1']
    %15 = vsyncpa [#allocation3], 0
    // Predicated region
    $region2: #{tpu_custom_call.1} parent=1 // pred_check
      _
    $region3: #{tpu_custom_call.1} parent=1 // pred_check_branch
      %17 = sbr.rel (0) target = $region5
    $region4: #{tpu_custom_call.1} parent=1 // pred_region
      _
    $region5: #{tpu_custom_call.1} parent=1 // pred_fallthru
      _
    // Predicated region
    $region6: #{tpu_custom_call.1} parent=1 // pred_check
      _
    $region7: #{tpu_custom_call.1} parent=1 // pred_check_branch
      %19 = sbr.rel (0) target = $region9
    $region8: #{tpu_custom_call.1} parent=1 // pred_region
      _
    $region9: #{tpu_custom_call.1} parent=1 // pred_fallthru
      _
    // Predicated region
    $region10: #{tpu_custom_call.1} parent=1 // pred_check
      _
    $region11: #{tpu_custom_call.1} parent=1 // pred_check_branch
      %21 = sbr.rel (0) target = $region13
    $region12: #{tpu_custom_call.1} parent=1 // pred_region
      _
    $region13: #{tpu_custom_call.1} parent=1 // pred_fallthru
      _
    // Predicated region
    $region14: #{tpu_custom_call.1} parent=1 // pred_check
      _
    $region15: #{tpu_custom_call.1} parent=1 // pred_check_branch
      %23 = sbr.rel (0) target = $region17
    $region16: #{tpu_custom_call.1} parent=1 // pred_region
      _
    $region17: #{tpu_custom_call.1} parent=1 // pred_fallthru
      _
    // Predicated region
    $region18: #{tpu_custom_call.1} parent=1 // pred_check
      _
    $region19: #{tpu_custom_call.1} parent=1 // pred_check_branch
      %25 = sbr.rel (0) target = $region21
    $region20: #{tpu_custom_call.1} parent=1 // pred_region
      _
    $region21: #{tpu_custom_call.1} parent=1 // pred_fallthru
      _
    // Predicated region
    $region22: #{tpu_custom_call.1} parent=1 // pred_check
      _
    $region23: #{tpu_custom_call.1} parent=1 // pred_check_branch
      %27 = sbr.rel (0) target = $region25
    $region24: #{tpu_custom_call.1} parent=1 // pred_region
      _
    $region25: #{tpu_custom_call.1} parent=1 // pred_fallthru
      _
    // Predicated region
    $region26: #{tpu_custom_call.1} parent=1 // pred_check
      _
    $region27: #{tpu_custom_call.1} parent=1 // pred_check_branch
      %29 = sbr.rel (0) target = $region29
    $region28: #{tpu_custom_call.1} parent=1 // pred_region
      _
    $region29: #{tpu_custom_call.1} parent=1 // pred_fallthru
      _
    // Predicated region
    $region30: #{tpu_custom_call.1} parent=1 // pred_check
      _
    $region31: #{tpu_custom_call.1} parent=1 // pred_check_branch
      %31 = sbr.rel (0) target = $region33
    $region32: #{tpu_custom_call.1} parent=1 // pred_region
      _
    $region33: #{tpu_custom_call.1} parent=1 // pred_fallthru
      _
    // Predicated region
    $region34: #{tpu_custom_call.1} parent=1 // pred_check
      _
    $region35: #{tpu_custom_call.1} parent=1 // pred_check_branch
      %33 = sbr.rel (0) target = $region37
    $region36: #{tpu_custom_call.1} parent=1 // pred_region
      _
    $region37: #{tpu_custom_call.1} parent=1 // pred_fallthru
      _
    // Predicated region
    $region38: #{tpu_custom_call.1} parent=1 // pred_check
      _
    $region39: #{tpu_custom_call.1} parent=1 // pred_check_branch
      %35 = sbr.rel (0) target = $region41
    $region40: #{tpu_custom_call.1} parent=1 // pred_region
      _
    $region41: #{tpu_custom_call.1} parent=1 // pred_fallthru
      _
    %v37 = vld [vmem:[%s0] sm:$0xf]
    %v38 = vld [vmem:[%s0 + $0x4] sm:$0xf]
    %v39 = vld [vmem:[%s4] sm:$0xf]
    %v40 = vld [vmem:[%s4 + $0x4] sm:$0xf]
    %v41 = vld [vmem:[%s4 + $0x8] sm:$0xf]
    %v42 = vld [vmem:[%s4 + $0xc] sm:$0xf]
    %v43 = vld [vmem:[%s1] sm:$0xf]
    %v44 = vld [vmem:[%s1 + $0x4] sm:$0xf]
    %v45 = vld [vmem:[%s4 + $0x10] sm:$0xf]
    %v46 = vld [vmem:[%s4 + $0x14] sm:$0xf]
    %v47 = vld [vmem:[%s4 + $0x18] sm:$0xf]
    %v48 = vld [vmem:[%s4 + $0x1c] sm:$0xf]
    %v51 = vunpack.c.l.b16 %v43
    %v52 = vunpack.c.l.b16 %v44
    %v53 = vpack.c.b16 %v52, %v51
    %v58 = vunpack.c.l.b16 %v45
    %v59 = vunpack.c.l.b16 %v46
    %v60 = vunpack.c.l.b16 %v47
    %v61 = vunpack.c.l.b16 %v48
    %v62 = vpack.c.b16 %v59, %v58
    %v63 = vpack.c.b16 %v61, %v60
    %vm66 = vcmask 261120
    %v68 = vsel %vm66, %v53, 0
    %70 = vmatprep.subr.bf16.mxu0 0
    %71 = vmatpush1.bf16.msra.mxu0 %v62
    %72 = vmatprep.subr.bf16.mxu0 0
    %73 = vmatpush1.bf16.msra.mxu0 %v63
    %74 = vmatprep.subr.bf16.mxu0 0
    %75 = vmatpush1.bf16.msra.mxu0 0
    %76 = vmatprep.subr.bf16.mxu0 0
    %77 = vmatpush1.bf16.msra.mxu0 0
    %78 = vmatprep.subr.bf16.mxu0 0
    %79 = vmatpush1.bf16.msra.mxu0 0
    %80 = vmatprep.subr.bf16.mxu0 0
    %81 = vmatpush1.bf16.msra.mxu0 0
    %82 = vmatprep.subr.bf16.mxu0 0
    %83 = vmatpush1.bf16.msra.mxu0 0
    %84 = vmatprep.subr.bf16.mxu0 0
    %85 = vmatpush1.bf16.msra.mxu0 0
    %86 = vmatprep.subr.bf16.mxu0 0
    %87 = vmatpush1.bf16.msra.mxu0 0
    %88 = vmatprep.subr.bf16.mxu0 0
    %89 = vmatpush1.bf16.msra.mxu0 0
    %90 = vmatprep.subr.bf16.mxu0 0
    %91 = vmatpush1.bf16.msra.mxu0 0
    %92 = vmatprep.subr.bf16.mxu0 0
    %93 = vmatpush1.bf16.msra.mxu0 0
    %94 = vmatprep.subr.bf16.mxu0 0
    %95 = vmatpush1.bf16.msra.mxu0 0
    %96 = vmatprep.subr.bf16.mxu0 0
    %97 = vmatpush1.bf16.msra.mxu0 0
    %98 = vmatprep.subr.bf16.mxu0 0
    %99 = vmatpush1.bf16.msra.mxu0 0
    %100 = vmatprep.subr.bf16.mxu0 0
    %101 = vmatpush1.bf16.msra.mxu0 0
    %102 = vmatprep.mubr.bf16.mxu0 0
    %103 = vmatmul.mubr.bf16.gmra.mrb[0].mxu0 %v68
    %v104 = vpop.f32.mrb[0].mxu0
    %v105 = vadd.f32 0.0, %v104
    %v106 = vpop.f32.mrb[0].mxu0
    %v107 = vpop.f32.mrb[0].mxu0
    %v108 = vadd.f32 0.0, %v107
    %v109 = vpop.f32.mrb[0].mxu0
    %110 = vdwg.mxu0
    %v113 = vunpack.c.l.b16 %v37
    %v114 = vunpack.c.l.b16 %v38
    %v115 = vpack.c.b16 %v114, %v113
    %v120 = vunpack.c.l.b16 %v39
    %v121 = vunpack.c.l.b16 %v40
    %v122 = vunpack.c.l.b16 %v41
    %v123 = vunpack.c.l.b16 %v42
    %v124 = vpack.c.b16 %v121, %v120
    %v125 = vpack.c.b16 %v123, %v122
    %v129 = vsel %vm66, %v115, 0
    %131 = vmatprep.subr.bf16.mxu0 0
    %132 = vmatpush1.bf16.msra.mxu0 %v124
    %133 = vmatprep.subr.bf16.mxu0 0
    %134 = vmatpush1.bf16.msra.mxu0 %v125
    %135 = vmatprep.subr.bf16.mxu0 0
    %136 = vmatpush1.bf16.msra.mxu0 0
    %137 = vmatprep.subr.bf16.mxu0 0
    %138 = vmatpush1.bf16.msra.mxu0 0
    %139 = vmatprep.subr.bf16.mxu0 0
    %140 = vmatpush1.bf16.msra.mxu0 0
    %141 = vmatprep.subr.bf16.mxu0 0
    %142 = vmatpush1.bf16.msra.mxu0 0
    %143 = vmatprep.subr.bf16.mxu0 0
    %144 = vmatpush1.bf16.msra.mxu0 0
    %145 = vmatprep.subr.bf16.mxu0 0
    %146 = vmatpush1.bf16.msra.mxu0 0
    %147 = vmatprep.subr.bf16.mxu0 0
    %148 = vmatpush1.bf16.msra.mxu0 0
    %149 = vmatprep.subr.bf16.mxu0 0
    %150 = vmatpush1.bf16.msra.mxu0 0
    %151 = vmatprep.subr.bf16.mxu0 0
    %152 = vmatpush1.bf16.msra.mxu0 0
    %153 = vmatprep.subr.bf16.mxu0 0
    %154 = vmatpush1.bf16.msra.mxu0 0
    %155 = vmatprep.subr.bf16.mxu0 0
    %156 = vmatpush1.bf16.msra.mxu0 0
    %157 = vmatprep.subr.bf16.mxu0 0
    %158 = vmatpush1.bf16.msra.mxu0 0
    %159 = vmatprep.subr.bf16.mxu0 0
    %160 = vmatpush1.bf16.msra.mxu0 0
    %161 = vmatprep.subr.bf16.mxu0 0
    %162 = vmatpush1.bf16.msra.mxu0 0
    %163 = vmatprep.mubr.bf16.mxu0 0
    %164 = vmatmul.mubr.bf16.gmra.mrb[0].mxu0 %v129
    %v165 = vpop.f32.mrb[0].mxu0
    %v166 = vadd.f32 %v105, %v165
    %v167 = vpop.f32.mrb[0].mxu0
    %v168 = vpop.f32.mrb[0].mxu0
    %v169 = vadd.f32 %v108, %v168
    %v170 = vpop.f32.mrb[0].mxu0
    %171 = vdwg.mxu0
    %v172 = vld [vmem:[%s2] sm:$0xf]
    %v173 = vld [vmem:[%s2 + $0x4] sm:$0xf]
    %v174 = vld [vmem:[%s4 + $0x20] sm:$0xf]
    %v175 = vld [vmem:[%s4 + $0x24] sm:$0xf]
    %v176 = vld [vmem:[%s4 + $0x28] sm:$0xf]
    %v177 = vld [vmem:[%s4 + $0x2c] sm:$0xf]
    %v180 = vunpack.c.l.b16 %v172
    %v181 = vunpack.c.l.b16 %v173
    %v182 = vpack.c.b16 %v181, %v180
    %v187 = vunpack.c.l.b16 %v174
    %v188 = vunpack.c.l.b16 %v175
    %v189 = vunpack.c.l.b16 %v176
    %v190 = vunpack.c.l.b16 %v177
    %v191 = vpack.c.b16 %v188, %v187
    %v192 = vpack.c.b16 %v190, %v189
    %v196 = vsel %vm66, %v182, 0
    %198 = vmatprep.subr.bf16.mxu0 0
    %199 = vmatpush1.bf16.msra.mxu0 %v191
    %200 = vmatprep.subr.bf16.mxu0 0
    %201 = vmatpush1.bf16.msra.mxu0 %v192
    %202 = vmatprep.subr.bf16.mxu0 0
    %203 = vmatpush1.bf16.msra.mxu0 0
    %204 = vmatprep.subr.bf16.mxu0 0
    %205 = vmatpush1.bf16.msra.mxu0 0
    %206 = vmatprep.subr.bf16.mxu0 0
    %207 = vmatpush1.bf16.msra.mxu0 0
    %208 = vmatprep.subr.bf16.mxu0 0
    %209 = vmatpush1.bf16.msra.mxu0 0
    %210 = vmatprep.subr.bf16.mxu0 0
    %211 = vmatpush1.bf16.msra.mxu0 0
    %212 = vmatprep.subr.bf16.mxu0 0
    %213 = vmatpush1.bf16.msra.mxu0 0
    %214 = vmatprep.subr.bf16.mxu0 0
    %215 = vmatpush1.bf16.msra.mxu0 0
    %216 = vmatprep.subr.bf16.mxu0 0
    %217 = vmatpush1.bf16.msra.mxu0 0
    %218 = vmatprep.subr.bf16.mxu0 0
    %219 = vmatpush1.bf16.msra.mxu0 0
    %220 = vmatprep.subr.bf16.mxu0 0
    %221 = vmatpush1.bf16.msra.mxu0 0
    %222 = vmatprep.subr.bf16.mxu0 0
    %223 = vmatpush1.bf16.msra.mxu0 0
    %224 = vmatprep.subr.bf16.mxu0 0
    %225 = vmatpush1.bf16.msra.mxu0 0
    %226 = vmatprep.subr.bf16.mxu0 0
    %227 = vmatpush1.bf16.msra.mxu0 0
    %228 = vmatprep.subr.bf16.mxu0 0
    %229 = vmatpush1.bf16.msra.mxu0 0
    %230 = vmatprep.mubr.bf16.mxu0 0
    %231 = vmatmul.mubr.bf16.gmra.mrb[0].mxu0 %v196
    %v232 = vpop.f32.mrb[0].mxu0
    %v233 = vadd.f32 0.0, %v232
    %v234 = vpop.f32.mrb[0].mxu0
    %v235 = vpop.f32.mrb[0].mxu0
    %v236 = vadd.f32 0.0, %v235
    %v237 = vpop.f32.mrb[0].mxu0
    %238 = vdwg.mxu0
    %v239 = vadd.f32 %v166, %v233
    %v240 = vadd.f32 %v169, %v236
    %v241 = vld [vmem:[%s3] sm:$0xf]
    %v242 = vld [vmem:[%s3 + $0x4] sm:$0xf]
    %v243 = vld [vmem:[%s4 + $0x30] sm:$0xf]
    %v244 = vld [vmem:[%s4 + $0x34] sm:$0xf]
    %v245 = vld [vmem:[%s4 + $0x38] sm:$0xf]
    %v246 = vld [vmem:[%s4 + $0x3c] sm:$0xf]
    %v249 = vunpack.c.l.b16 %v241
    %v250 = vunpack.c.l.b16 %v242
    %v251 = vpack.c.b16 %v250, %v249
    %v256 = vunpack.c.l.b16 %v243
    %v257 = vunpack.c.l.b16 %v244
    %v258 = vunpack.c.l.b16 %v245
    %v259 = vunpack.c.l.b16 %v246
    %v260 = vpack.c.b16 %v257, %v256
    %v261 = vpack.c.b16 %v259, %v258
    %v265 = vsel %vm66, %v251, 0
    %267 = vmatprep.subr.bf16.mxu0 0
    %268 = vmatpush1.bf16.msra.mxu0 %v260
    %269 = vmatprep.subr.bf16.mxu0 0
    %270 = vmatpush1.bf16.msra.mxu0 %v261
    %271 = vmatprep.subr.bf16.mxu0 0
    %272 = vmatpush1.bf16.msra.mxu0 0
    %273 = vmatprep.subr.bf16.mxu0 0
    %274 = vmatpush1.bf16.msra.mxu0 0
    %275 = vmatprep.subr.bf16.mxu0 0
    %276 = vmatpush1.bf16.msra.mxu0 0
    %277 = vmatprep.subr.bf16.mxu0 0
    %278 = vmatpush1.bf16.msra.mxu0 0
    %279 = vmatprep.subr.bf16.mxu0 0
    %280 = vmatpush1.bf16.msra.mxu0 0
    %281 = vmatprep.subr.bf16.mxu0 0
    %282 = vmatpush1.bf16.msra.mxu0 0
    %283 = vmatprep.subr.bf16.mxu0 0
    %284 = vmatpush1.bf16.msra.mxu0 0
    %285 = vmatprep.subr.bf16.mxu0 0
    %286 = vmatpush1.bf16.msra.mxu0 0
    %287 = vmatprep.subr.bf16.mxu0 0
    %288 = vmatpush1.bf16.msra.mxu0 0
    %289 = vmatprep.subr.bf16.mxu0 0
    %290 = vmatpush1.bf16.msra.mxu0 0
    %291 = vmatprep.subr.bf16.mxu0 0
    %292 = vmatpush1.bf16.msra.mxu0 0
    %293 = vmatprep.subr.bf16.mxu0 0
    %294 = vmatpush1.bf16.msra.mxu0 0
    %295 = vmatprep.subr.bf16.mxu0 0
    %296 = vmatpush1.bf16.msra.mxu0 0
    %297 = vmatprep.subr.bf16.mxu0 0
    %298 = vmatpush1.bf16.msra.mxu0 0
    %299 = vmatprep.mubr.bf16.mxu0 0
    %300 = vmatmul.mubr.bf16.gmra.mrb[0].mxu0 %v265
    %v301 = vpop.f32.mrb[0].mxu0
    %v302 = vadd.f32 0.0, %v301
    %v303 = vpop.f32.mrb[0].mxu0
    %v304 = vpop.f32.mrb[0].mxu0
    %v305 = vadd.f32 0.0, %v304
    %v306 = vpop.f32.mrb[0].mxu0
    %307 = vdwg.mxu0
    %v308 = vadd.f32 %v239, %v302
    %v309 = vadd.f32 %v240, %v305
    %v310 = vld [vmem:[%s5] sm:$0x1]
    %v312 = vlaneseq
    %v313 = vshrl.u32 %v312, 7
    %v314 = vsub.s32 0, %v313
    %v315 = vrot.slane %v310, %v314
    %v317 = vadd.f32 %v308, %v315
    %v318 = vadd.f32 %v309, %v315
    %v319 = vmax.f32 %v317, 0.0
    %v320 = vmax.f32 %v318, 0.0
    %v321 = vand.u32 2147483647, %v317
    %v322 = vand.u32 2147483647, %v318
    %v323 = vsub.f32 0.0, %v321
    %v324 = vsub.f32 0.0, %v322
    %v325 = vmul.f32 %v323, 1.442695
    %v326 = vpow.pop %v325
    %v327 = vmul.f32 %v324, 1.442695
    %v328 = vpow.pop %v327
    %v329 = vadd.f32 %v326, 1.0
    %v330 = vlog2.pop %v329
    %v331 = vmul.f32 %v330, 0.6931472
    %v332 = vmul.f32 -0.5, %v326
    %v333 = vadd.f32 %v332, 1.0
    %v334 = vmul.f32 %v333, %v326
    %v335 = vand.u32 2147483647, %v326
    %vm336 = vcmp.lt.f32.partialorder %v335, 0.0004427343
    %v337 = vsel %vm336, %v334, %v331
    %v338 = vadd.f32 %v328, 1.0
    %v339 = vlog2.pop %v338
    %v340 = vmul.f32 %v339, 0.6931472
    %v341 = vmul.f32 -0.5, %v328
    %v342 = vadd.f32 %v341, 1.0
    %v343 = vmul.f32 %v342, %v328
    %v344 = vand.u32 2147483647, %v328
    %vm345 = vcmp.lt.f32.partialorder %v344, 0.0004427343
    %v346 = vsel %vm345, %v343, %v340
    %v347 = vadd.f32 %v319, %v337
    %v348 = vadd.f32 %v320, %v346
    %v349 = vtanh.pop %v347
    %v350 = vtanh.pop %v348
    %v351 = vmul.f32 %v317, %v349
    %v352 = vmul.f32 %v318, %v350
    %v353 = vld [vmem:[%s6] sm:$0xf]
    %v354 = vld [vmem:[%s6 + $0x4] sm:$0xf]
    %v355 = vld [vmem:[%s6 + $0x8] sm:$0xf]
    %v356 = vld [vmem:[%s6 + $0xc] sm:$0xf]
    %v357 = vld [vmem:[%s6 + $0x10] sm:$0xf]
    %v358 = vld [vmem:[%s6 + $0x14] sm:$0xf]
    %v359 = vld [vmem:[%s6 + $0x18] sm:$0xf]
    %v360 = vld [vmem:[%s6 + $0x1c] sm:$0xf]
    %v361 = vpack.c.bf16 %v352, %v351
    %v362 = vld [vmem:[%s7] sm:$0x1]
    %v364 = vlaneseq
    %v365 = vshrl.u32 %v364, 7
    %v366 = vsub.s32 0, %v365
    %v367 = vrot.slane %v362, %v366
    %v377 = vunpack.c.l.b16 %v353
    %v378 = vunpack.c.l.b16 %v354
    %v379 = vunpack.c.l.b16 %v355
    %v380 = vunpack.c.l.b16 %v356
    %v381 = vunpack.c.l.b16 %v357
    %v382 = vunpack.c.l.b16 %v358
    %v383 = vunpack.c.l.b16 %v359
    %v384 = vunpack.c.l.b16 %v360
    %v385 = vpack.c.b16 %v378, %v377
    %v386 = vpack.c.b16 %v380, %v379
    %v387 = vpack.c.b16 %v382, %v381
    %v388 = vpack.c.b16 %v384, %v383
    %vm393 = vcmask 523264
    %v395 = vsel %vm393, %v361, 0
    %397 = vmatprep.subr.bf16.mxu0 0
    %398 = vmatpush1.bf16.msra.mxu0 %v385
    %399 = vmatprep.subr.bf16.mxu0 0
    %400 = vmatpush1.bf16.msra.mxu0 %v386
    %401 = vmatprep.subr.bf16.mxu0 0
    %402 = vmatpush1.bf16.msra.mxu0 %v387
    %403 = vmatprep.subr.bf16.mxu0 0
    %404 = vmatpush1.bf16.msra.mxu0 %v388
    %405 = vmatprep.subr.bf16.mxu0 0
    %406 = vmatpush1.bf16.msra.mxu0 0
    %407 = vmatprep.subr.bf16.mxu0 0
    %408 = vmatpush1.bf16.msra.mxu0 0
    %409 = vmatprep.subr.bf16.mxu0 0
    %410 = vmatpush1.bf16.msra.mxu0 0
    %411 = vmatprep.subr.bf16.mxu0 0
    %412 = vmatpush1.bf16.msra.mxu0 0
    %413 = vmatprep.subr.bf16.mxu0 0
    %414 = vmatpush1.bf16.msra.mxu0 0
    %415 = vmatprep.subr.bf16.mxu0 0
    %416 = vmatpush1.bf16.msra.mxu0 0
    %417 = vmatprep.subr.bf16.mxu0 0
    %418 = vmatpush1.bf16.msra.mxu0 0
    %419 = vmatprep.subr.bf16.mxu0 0
    %420 = vmatpush1.bf16.msra.mxu0 0
    %421 = vmatprep.subr.bf16.mxu0 0
    %422 = vmatpush1.bf16.msra.mxu0 0
    %423 = vmatprep.subr.bf16.mxu0 0
    %424 = vmatpush1.bf16.msra.mxu0 0
    %425 = vmatprep.subr.bf16.mxu0 0
    %426 = vmatpush1.bf16.msra.mxu0 0
    %427 = vmatprep.subr.bf16.mxu0 0
    %428 = vmatpush1.bf16.msra.mxu0 0
    %429 = vmatprep.mubr.bf16.mxu0 0
    %430 = vmatmul.mubr.bf16.gmra.mrb[0].mxu0 %v395
    %v431 = vpop.f32.mrb[0].mxu0
    %v432 = vadd.f32 %v367, %v431
    %v433 = vpop.f32.mrb[0].mxu0
    %v434 = vpop.f32.mrb[0].mxu0
    %v435 = vadd.f32 %v367, %v434
    %v436 = vpop.f32.mrb[0].mxu0
    %437 = vdwg.mxu0
    %v438 = vmax.f32 %v432, 0.0
    %v439 = vmax.f32 %v435, 0.0
    %v440 = vand.u32 2147483647, %v432
    %v441 = vand.u32 2147483647, %v435
    %v442 = vsub.f32 0.0, %v440
    %v443 = vsub.f32 0.0, %v441
    %v444 = vmul.f32 %v442, 1.442695
    %v445 = vpow.pop %v444
    %v446 = vmul.f32 %v443, 1.442695
    %v447 = vpow.pop %v446
    %v448 = vadd.f32 %v445, 1.0
    %v449 = vlog2.pop %v448
    %v450 = vmul.f32 %v449, 0.6931472
    %v451 = vmul.f32 -0.5, %v445
    %v452 = vadd.f32 %v451, 1.0
    %v453 = vmul.f32 %v452, %v445
    %v454 = vand.u32 2147483647, %v445
    %vm455 = vcmp.lt.f32.partialorder %v454, 0.0004427343
    %v456 = vsel %vm455, %v453, %v450
    %v457 = vadd.f32 %v447, 1.0
    %v458 = vlog2.pop %v457
    %v459 = vmul.f32 %v458, 0.6931472
    %v460 = vmul.f32 -0.5, %v447
    %v461 = vadd.f32 %v460, 1.0
    %v462 = vmul.f32 %v461, %v447
    %v463 = vand.u32 2147483647, %v447
    %vm464 = vcmp.lt.f32.partialorder %v463, 0.0004427343
    %v465 = vsel %vm464, %v462, %v459
    %v466 = vadd.f32 %v438, %v456
    %v467 = vadd.f32 %v439, %v465
    %v468 = vtanh.pop %v466
    %v469 = vtanh.pop %v467
    %v470 = vmul.f32 %v432, %v468
    %v471 = vmul.f32 %v435, %v469
    %v472 = vld [vmem:[%s8] sm:$0xf]
    %v473 = vld [vmem:[%s8 + $0x4] sm:$0xf]
    %v474 = vld [vmem:[%s8 + $0x8] sm:$0xf]
    %v475 = vld [vmem:[%s8 + $0xc] sm:$0xf]
    %v476 = vpack.c.bf16 %v471, %v470
    %v477 = vld [vmem:[%s9] sm:$0x1]
    %v479 = vlaneseq
    %v480 = vshrl.u32 %v479, 7
    %v481 = vsub.s32 0, %v480
    %v482 = vrot.slane %v477, %v481
    %v488 = vunpack.c.l.b16 %v472
    %v489 = vunpack.c.l.b16 %v473
    %v490 = vunpack.c.l.b16 %v474
    %v491 = vunpack.c.l.b16 %v475
    %v492 = vpack.c.b16 %v489, %v488
    %v493 = vpack.c.b16 %v491, %v490
    %v497 = vsel %vm66, %v476, 0
    %499 = vmatprep.subr.bf16.mxu0 0
    %500 = vmatpush1.bf16.msra.mxu0 %v492
    %501 = vmatprep.subr.bf16.mxu0 0
    %502 = vmatpush1.bf16.msra.mxu0 %v493
    %503 = vmatprep.subr.bf16.mxu0 0
    %504 = vmatpush1.bf16.msra.mxu0 0
    %505 = vmatprep.subr.bf16.mxu0 0
    %506 = vmatpush1.bf16.msra.mxu0 0
    %507 = vmatprep.subr.bf16.mxu0 0
    %508 = vmatpush1.bf16.msra.mxu0 0
    %509 = vmatprep.subr.bf16.mxu0 0
    %510 = vmatpush1.bf16.msra.mxu0 0
    %511 = vmatprep.subr.bf16.mxu0 0
    %512 = vmatpush1.bf16.msra.mxu0 0
    %513 = vmatprep.subr.bf16.mxu0 0
    %514 = vmatpush1.bf16.msra.mxu0 0
    %515 = vmatprep.subr.bf16.mxu0 0
    %516 = vmatpush1.bf16.msra.mxu0 0
    %517 = vmatprep.subr.bf16.mxu0 0
    %518 = vmatpush1.bf16.msra.mxu0 0
    %519 = vmatprep.subr.bf16.mxu0 0
    %520 = vmatpush1.bf16.msra.mxu0 0
    %521 = vmatprep.subr.bf16.mxu0 0
    %522 = vmatpush1.bf16.msra.mxu0 0
    %523 = vmatprep.subr.bf16.mxu0 0
    %524 = vmatpush1.bf16.msra.mxu0 0
    %525 = vmatprep.subr.bf16.mxu0 0
    %526 = vmatpush1.bf16.msra.mxu0 0
    %527 = vmatprep.subr.bf16.mxu0 0
    %528 = vmatpush1.bf16.msra.mxu0 0
    %529 = vmatprep.subr.bf16.mxu0 0
    %530 = vmatpush1.bf16.msra.mxu0 0
    %531 = vmatprep.mubr.bf16.mxu0 0
    %532 = vmatmul.mubr.bf16.gmra.mrb[0].mxu0 %v497
    %v533 = vpop.f32.mrb[0].mxu0
    %v534 = vadd.f32 %v482, %v533
    %v535 = vpop.f32.mrb[0].mxu0
    %v536 = vpop.f32.mrb[0].mxu0
    %v537 = vadd.f32 %v482, %v536
    %v538 = vpop.f32.mrb[0].mxu0
    %539 = vdwg.mxu0
    %540 = vst [vmem:[#allocation2] sm:$0xff] %v534
    %541 = vst [vmem:[#allocation2 + $0x8] sm:$0xff] %v537
    // Predicated region
    $region42: #{tpu_custom_call.1} parent=1 // pred_check
      _
    $region43: #{tpu_custom_call.1} parent=1 // pred_check_branch
      %543 = sbr.rel (0) target = $region45
    $region44: #{tpu_custom_call.1} parent=1 // pred_region
      %s545 = ssub.s32 256, 256
      %546 = vsyncadd [#allocation3], %s545
      %s547 = sshll.u32 [#allocation2], 4
      %s548 = int_to_ptr.vmem [resolvable:$true] %s547
      %553 = dma.vmem_to_hbm [thread:$0]  %s548, 256, %s10, [#allocation3], 128, 128, 8
    $region45: #{tpu_custom_call.1} parent=1 // pred_fallthru
      _
    // Predicated region
    $region46: #{tpu_custom_call.1} parent=1 // pred_check
      _
    $region47: #{tpu_custom_call.1} parent=1 // pred_check_branch
      %555 = sbr.rel (0) target = $region49
    $region48: #{tpu_custom_call.1} parent=1 // pred_region
      %556 = dma.done [#allocation3], 256
    $region49: #{tpu_custom_call.1} parent=1 // pred_fallthru
      _
    %557 = vsyncpa [#allocation3], 1

</llo_original>
